<compile_context>
chip_gen: v5e
topology: v5e:2x2
jax: 0.10.0
libtpu: 0.0.40
codegen_flags: <defaults>
</compile_context>

<pallas_src>
import jax
import jax.numpy as jnp
from jax.experimental import pallas as pl
from jax.experimental.pallas import tpu as pltpu


_VMEM_LIMIT = 32 * 1024 * 1024  # >= default scoped VMEM on v5e/v6e/v7x, << physical


def _round_up(n, m):
    return ((n + m - 1) // m) * m


# ----------------------------- Pallas kernels -------------------------------

def _mlp_relu_kernel(*refs):
    """refs = (w0, b0, w1, b1, ..., h, o).  Applies relu(w @ h + b) per layer.

    Feature-major: h is [in_dim, TN]; nodes sit on the 128-lane axis so the MXU
    tiles and the output stores are lane-dense regardless of the small hidden dim.
    """
    *wb_refs, h_ref, o_ref = refs
    h = h_ref[...]
    for i in range(0, len(wb_refs), 2):
        w = wb_refs[i][...]
        b = wb_refs[i + 1][...]
        h = jnp.maximum(
            jnp.dot(w, h, preferred_element_type=jnp.float32) + b, 0.0)
    o_ref[...] = h


def _prop_kernel(h_ref, st_ref, o_ref, acc_ref):
    """One graph propagation step, feature-major:  o = h @ S^T  (== (S h)^T).

    Grid = (node_tile_j ["parallel"], contraction_tile_k ["arbitrary"]).
    S^T arrives as bf16 blocks; h is cast to bf16 at the dot; the accumulator
    stays f32 in VMEM and is written out on the last k step.
    """
    k = pl.program_id(1)

    @pl.when(k == 0)
    def _():
        acc_ref[...] = jnp.zeros_like(acc_ref)

    acc_ref[...] += jnp.dot(h_ref[...].astype(jnp.bfloat16), st_ref[...],
                            preferred_element_type=jnp.float32)

    @pl.when(k == pl.num_programs(1) - 1)
    def _():
        o_ref[...] = acc_ref[...]


# ------------------------------ Pallas wrappers ------------------------------

def _mlp_relu(layers, h, *, tile_n):
    """layers: list of (w [out,in], b [out,1]); h: [in, N_pad] f32 -> [out, N_pad]."""
    n_pad = h.shape[1]
    out_rows = layers[-1][0].shape[0]
    nj = n_pad // tile_n

    in_specs = []
    args = []
    for w, b in layers:
        in_specs.append(pl.BlockSpec(w.shape, lambda j: (0, 0)))
        in_specs.append(pl.BlockSpec(b.shape, lambda j: (0, 0)))
        args += [w, b]
    in_specs.append(pl.BlockSpec((h.shape[0], tile_n), lambda j: (0, j)))
    args.append(h)

    return pl.pallas_call(
        _mlp_relu_kernel,
        out_shape=jax.ShapeDtypeStruct((out_rows, n_pad), jnp.float32),
        grid_spec=pltpu.PrefetchScalarGridSpec(
            num_scalar_prefetch=0,
            grid=(nj,),
            in_specs=in_specs,
            out_specs=pl.BlockSpec((out_rows, tile_n), lambda j: (0, j)),
        ),
        compiler_params=pltpu.CompilerParams(
            dimension_semantics=("parallel",),
            vmem_limit_bytes=_VMEM_LIMIT),
    )(*args)


def _propagate(h, st_bf16, *, tile_n, tile_k):
    """h: [H, N_pad] f32,  st_bf16: [N_pad, N_pad] bf16 (= S^T)  ->  h @ S^T."""
    H, n_pad = h.shape
    nj = n_pad // tile_n
    nk = n_pad // tile_k
    return pl.pallas_call(
        _prop_kernel,
        out_shape=jax.ShapeDtypeStruct((H, n_pad), jnp.float32),
        grid_spec=pltpu.PrefetchScalarGridSpec(
            num_scalar_prefetch=0,
            grid=(nj, nk),
            in_specs=[
                pl.BlockSpec((H, tile_k), lambda j, k: (0, k)),
                pl.BlockSpec((tile_k, tile_n), lambda j, k: (k, j)),
            ],
            out_specs=pl.BlockSpec((H, tile_n), lambda j, k: (0, j)),
            scratch_shapes=[pltpu.VMEM((H, tile_n), jnp.float32)],
        ),
        compiler_params=pltpu.CompilerParams(
            dimension_semantics=("parallel", "arbitrary"),
            vmem_limit_bytes=_VMEM_LIMIT),
    )(h, st_bf16)


def sgconvnet_forward(x, S, params, K=3, tile_n=512):
    """SGConvNet forward: lin0 -> SGConv(K) -> SGConv(K) -> lin1 -> lin2 -> lin3 -> relu."""
    N, F = x.shape
    n_pad = _round_up(N, 128)        # lane-align the node dimension
    f_pad = _round_up(F, 8)          # sublane-align the tiny feature dim
    tile = min(tile_n, n_pad)
    out_pad = 8                      # pad lin3's single output row to 8 sublanes

    # Feature-major, node-padded operands. Passing S^T makes h @ S^T == (S h)^T
    # without assuming graph symmetry. S^T in bf16 (f32 accumulation in-kernel).
    xt = jnp.zeros((f_pad, n_pad), jnp.float32).at[:F, :N].set(x.T)
    st = jnp.zeros((n_pad, n_pad), jnp.float32).at[:N, :N].set(S.T)
    st = st.astype(jnp.bfloat16)

    w0 = jnp.zeros((params["w0"].shape[0], f_pad),
                   jnp.float32).at[:, :F].set(params["w0"])
    w3 = params["w3"]
    b3 = params["b3"]
    w3p = jnp.zeros((out_pad, w3.shape[1]), jnp.float32).at[:1].set(w3)
    b3p = jnp.zeros((out_pad, 1), jnp.float32).at[:1].set(b3)

    # lin0
    h = _mlp_relu([(w0, params["b0"])], xt, tile_n=tile)
    # conv1: S^K h, then Linear + outer ReLU
    for _ in range(K):
        h = _propagate(h, st, tile_n=tile, tile_k=tile)
    h = _mlp_relu([(params["wc1"], params["bc1"])], h, tile_n=tile)
    # conv2: S^K h, then (Linear+ReLU, lin1, lin2, lin3+final ReLU) fused head
    for _ in range(K):
        h = _propagate(h, st, tile_n=tile, tile_k=tile)
    head = [(params["wc2"], params["bc2"]),
            (params["w1"], params["b1"]),
            (params["w2"], params["b2"]),
            (w3p, b3p)]
    y = _mlp_relu(head, h, tile_n=tile)          # [out_pad, n_pad], lane-dense store
    return y[0, :N][:, None]                     # -> [N, 1] node-major, unpadded


# --------------------------------- JAX glue ----------------------------------

def build_norm_adj(edge_index, num_nodes):
    """S = D^{-1/2} A_hat D^{-1/2}, matching PyG gcn_norm with
    add_remaining_self_loops: self-loops are only added to nodes lacking one."""
    src, dst = edge_index[0], edge_index[1]
    A = jnp.zeros((num_nodes, num_nodes), jnp.float32).at[dst, src].add(1.0)
    has_self = jnp.diag(A) > 0
    A = A + jnp.diag(jnp.where(has_self, 0.0, 1.0))
    deg = A.sum(axis=1)
    dinv = jnp.where(deg > 0, 1.0 / jnp.sqrt(deg), 0.0)
    return dinv[:, None] * A * dinv[None, :]


def init_params(key, node_features, hidden_dim):
    """Deterministic synthetic parameters, PyTorch layout: W [out, in], b [out, 1]."""
    keys = jax.random.split(key, 12)

    def lin(kw, kb, fan_in, fan_out):
        scale = 1.0 / jnp.sqrt(jnp.float32(fan_in))
        w = jax.random.uniform(kw, (fan_out, fan_in), jnp.float32, -scale, scale)
        b = jax.random.uniform(kb, (fan_out, 1), jnp.float32, -scale, scale)
        return w, b

    p = {}
    p["w0"], p["b0"] = lin(keys[0], keys[1], node_features, hidden_dim)
    p["wc1"], p["bc1"] = lin(keys[2], keys[3], hidden_dim, hidden_dim)
    p["wc2"], p["bc2"] = lin(keys[4], keys[5], hidden_dim, hidden_dim)
    p["w1"], p["b1"] = lin(keys[6], keys[7], hidden_dim, hidden_dim)
    p["w2"], p["b2"] = lin(keys[8], keys[9], hidden_dim, hidden_dim)
    p["w3"], p["b3"] = lin(keys[10], keys[11], hidden_dim, 1)
    return p


def reference_forward(x, S, params, K=3):
    """Pure-JAX node-major reference mirroring the kernel numerics (bf16 S / bf16 h
    at propagation, f32 accumulation and f32 bias+ReLU)."""
    f32 = jnp.float32
    relu = lambda v: jnp.maximum(v, 0.0)
    s_bf = S.astype(jnp.bfloat16)

    def lin(h, w, b):  # w: [out, in], b: [out, 1]
        return relu(jnp.dot(h, w.T, preferred_element_type=f32) + b.T)

    h = lin(x, params["w0"], params["b0"])
    for _ in range(K):
        h = jnp.dot(s_bf, h.astype(jnp.bfloat16), preferred_element_type=f32)
    h = lin(h, params["wc1"], params["bc1"])
    for _ in range(K):
        h = jnp.dot(s_bf, h.astype(jnp.bfloat16), preferred_element_type=f32)
    h = lin(h, params["wc2"], params["bc2"])
    h = lin(h, params["w1"], params["b1"])
    h = lin(h, params["w2"], params["b2"])
    return lin(h, params["w3"], params["b3"])  # lin3 + final ReLU


# ----------------------------------- main ------------------------------------

if __name__ == "__main__":
    NODE_FEATURES = 4
    HIDDEN = 32
    K = 3
    N_NODES = 16
    N_EDGES = 32

    key = jax.random.PRNGKey(0)
    k_x, k_src, k_dst, k_params = jax.random.split(key, 4)

    x = jax.random.normal(k_x, (N_NODES, NODE_FEATURES), jnp.float32)
    edge_index = jnp.stack([
        jax.random.randint(k_src, (N_EDGES,), 0, N_NODES),
        jax.random.randint(k_dst, (N_EDGES,), 0, N_NODES),
    ], axis=0)  # [2, E], (src, dst) as in PyG

    S = build_norm_adj(edge_index, N_NODES)
    params = init_params(k_params, NODE_FEATURES, HIDDEN)

    out = sgconvnet_forward(x, S, params, K=K)
    out = jax.block_until_ready(out)

    ref = reference_forward(x, S, params, K=K)
    assert out.shape == (N_NODES, 1)
    max_diff = float(jnp.max(jnp.abs(out - ref)))
    # bf16 S / bf16 h in the propagation -> loosened tolerance vs the f32-ish ref.
    assert jnp.allclose(out, ref, atol=2e-2, rtol=2e-2), \
        f"Pallas output mismatch: max |diff| = {max_diff}"

    print("KERNEL_OK")
</pallas_src>

<mosaic_0001>
module attributes {stable_mosaic.version = 11 : i64} {
  func.func @_mlp_relu_kernel(%arg0: i32, %arg1: memref<32x8xf32, #tpu.memory_space<vmem>>, %arg2: memref<32x1xf32, #tpu.memory_space<vmem>>, %arg3: memref<8x128xf32, #tpu.memory_space<vmem>>, %arg4: memref<32x128xf32, #tpu.memory_space<vmem>>) attributes {dimension_semantics = [#tpu.dimension_semantics<parallel>], iteration_bounds = array<i64: 1>, scalar_prefetch = 0 : i64, scratch_operands = 0 : i64, tpu.core_type = #tpu.core_type<tc>, window_params = [{pipeline_mode = #tpu.pipeline_mode<synchronous>, transform_indices = @transform_0, window_bounds = array<i64: 32, 8>}, {pipeline_mode = #tpu.pipeline_mode<synchronous>, transform_indices = @transform_1, window_bounds = array<i64: 32, 1>}, {transform_indices = @transform_2, window_bounds = array<i64: 8, 128>}, {transform_indices = @transform_3, window_bounds = array<i64: 32, 128>}]} {
    %c0 = arith.constant 0 : index
    %c0_0 = arith.constant 0 : index
    %0 = vector.load %arg3[%c0, %c0_0] : memref<8x128xf32, #tpu.memory_space<vmem>>, vector<8x128xf32>
    %c0_1 = arith.constant 0 : index
    %c0_2 = arith.constant 0 : index
    %1 = vector.load %arg1[%c0_1, %c0_2] : memref<32x8xf32, #tpu.memory_space<vmem>>, vector<32x8xf32>
    %c0_3 = arith.constant 0 : index
    %c0_4 = arith.constant 0 : index
    %2 = vector.load %arg2[%c0_3, %c0_4] : memref<32x1xf32, #tpu.memory_space<vmem>>, vector<32x1xf32>
    %cst = arith.constant dense<0.000000e+00> : vector<32x128xf32>
    %3 = tpu.matmul %1, %0, %cst {dimension_numbers = #tpu.dot_dimension_numbers<[1], [0], [0], [1], [0, 0, 1, 1], [], []>} : vector<32x8xf32>, vector<8x128xf32>, vector<32x128xf32> -> vector<32x128xf32>
    %4 = vector.broadcast %2 : vector<32x1xf32> to vector<32x128xf32>
    %5 = arith.addf %3, %4 : vector<32x128xf32>
    %cst_5 = arith.constant 0.000000e+00 : f32
    %6 = vector.broadcast %cst_5 : f32 to vector<32x128xf32>
    %7 = arith.maximumf %5, %6 : vector<32x128xf32>
    %c0_6 = arith.constant 0 : index
    %c0_7 = arith.constant 0 : index
    %8 = vector.load %arg4[%c0_6, %c0_7] : memref<32x128xf32, #tpu.memory_space<vmem>>, vector<32x128xf32>
    tpu.vector_store %arg4[%c0_6, %c0_7], %7 {strides = array<i32>} : memref<32x128xf32, #tpu.memory_space<vmem>>, vector<32x128xf32>,
    return
  }
  func.func @transform_0(%arg0: i32) -> (i32, i32) {
    %c0_i32 = arith.constant 0 : i32
    %c0_i32_0 = arith.constant 0 : i32
    %c0_i32_1 = arith.constant 0 : i32
    return %c0_i32, %c0_i32_0 : i32, i32
  }
  func.func @transform_1(%arg0: i32) -> (i32, i32) {
    %c0_i32 = arith.constant 0 : i32
    %c0_i32_0 = arith.constant 0 : i32
    %c0_i32_1 = arith.constant 0 : i32
    return %c0_i32, %c0_i32_0 : i32, i32
  }
  func.func @transform_2(%arg0: i32) -> (i32, i32) {
    %c0_i32 = arith.constant 0 : i32
    %c0_i32_0 = arith.constant 0 : i32
    return %c0_i32, %arg0 : i32, i32
  }
  func.func @transform_3(%arg0: i32) -> (i32, i32) {
    %c0_i32 = arith.constant 0 : i32
    %c0_i32_0 = arith.constant 0 : i32
    return %c0_i32, %arg0 : i32, i32
  }
}

</mosaic_0001>

<llo_original>
// kernel: tpu_custom_call.1
$region0: #{tpu_custom_call.1}
  #allocation0 [shape = 'u32[]', space=smem, size = 0x4, offset = 0x4, fixed_abs, tag = 'smem constant byte address 0x4 - core index']
  #allocation1 [shape = 'u32[72,128]{1,0:T(1,128)}', space=vmem, size = 0x9000, scoped, tag = 'internal scratch']
  %s0 = inlined_call_operand.vmem [shape: f32[32,8], index: 0, kind: input, shape index: {}]
  %s1 = inlined_call_operand.vmem [shape: f32[32,1], index: 1, kind: input, shape index: {}]
  %s2 = inlined_call_operand.vmem [shape: f32[8,128], index: 2, kind: input, shape index: {}]
  %s3 = inlined_call_operand.hbm [shape: f32[32,128], index: 3, kind: output, shape index: {}]
  %s4 = sld [smem:[#allocation0]]
  $region22: #{tpu_custom_call.1} parent=0
    _
  %s6 = ssub.s32 1, %s4
  %s7 = scalar_select 0, %s6, %s4
  $region1: #{tpu_custom_call.1} parent=0
    #allocation2 [shape = 'u8[16384]{0}', space=vmem, size = 0x4000, scoped, tag = 'output window, operand 0, single buffered']
    #allocation3 [shape = 's32[1]{0}', space=sflag, size = 0x4, scoped, tag = 'scoped memory for tpu_custom_call.1']
    %8 = vsyncpa [#allocation3], 0
    // Predicated region
    $region2: #{tpu_custom_call.1} parent=1 // pred_check
      _
    $region3: #{tpu_custom_call.1} parent=1 // pred_check_branch
      %10 = sbr.rel (0) target = $region5
    $region4: #{tpu_custom_call.1} parent=1 // pred_region
      _
    $region5: #{tpu_custom_call.1} parent=1 // pred_fallthru
      _
    // Predicated region
    $region6: #{tpu_custom_call.1} parent=1 // pred_check
      _
    $region7: #{tpu_custom_call.1} parent=1 // pred_check_branch
      %12 = sbr.rel (0) target = $region9
    $region8: #{tpu_custom_call.1} parent=1 // pred_region
      _
    $region9: #{tpu_custom_call.1} parent=1 // pred_fallthru
      _
    // Predicated region
    $region10: #{tpu_custom_call.1} parent=1 // pred_check
      _
    $region11: #{tpu_custom_call.1} parent=1 // pred_check_branch
      %14 = sbr.rel (0) target = $region13
    $region12: #{tpu_custom_call.1} parent=1 // pred_region
      _
    $region13: #{tpu_custom_call.1} parent=1 // pred_fallthru
      _
    %v15 = vld [vmem:[%s2] sm:$0xff]
    %v16 = vld [vmem:[%s0] sm:$0xff]
    %v17 = vld [vmem:[%s0 + $0x8] sm:$0xff]
    %v18 = vld [vmem:[%s0 + $0x10] sm:$0xff]
    %v19 = vld [vmem:[%s0 + $0x18] sm:$0xff]
    %v20 = vld [vmem:[%s1] sm:$0xff]
    %v21 = vld [vmem:[%s1 + $0x8] sm:$0xff]
    %v22 = vld [vmem:[%s1 + $0x10] sm:$0xff]
    %v23 = vld [vmem:[%s1 + $0x18] sm:$0xff]
    %25 = vset.pattern.permute.xlu0 0
    %26 = vperm.xlu0 %25, %v20
    %v27 = vpop.permute.xlu0 %26
    %30 = vset.pattern.permute.xlu0 0
    %31 = vperm.xlu0 %30, %v21
    %v32 = vpop.permute.xlu0 %31
    %35 = vset.pattern.permute.xlu0 0
    %36 = vperm.xlu0 %35, %v22
    %v37 = vpop.permute.xlu0 %36
    %40 = vset.pattern.permute.xlu0 0
    %41 = vperm.xlu0 %40, %v23
    %v42 = vpop.permute.xlu0 %41
    %vm44 = vcmask 64512
    %v46 = vsel %vm44, %v16, 0
    %v49 = vsel %vm44, %v17, 0
    %v52 = vsel %vm44, %v18, 0
    %v55 = vsel %vm44, %v19, 0
    %57 = vmatpush.msra.mxu0 0.0
    %58 = vmatpush.msra.mxu0 0.0
    %59 = vmatpush.msra.mxu0 0.0
    %60 = vmatpush.msra.mxu0 0.0
    %61 = vmatpush.msra.mxu0 0.0
    %62 = vmatpush.msra.mxu0 0.0
    %63 = vmatpush.msra.mxu0 0.0
    %64 = vmatpush.msra.mxu0 0.0
    %65 = vmatpush.msra.mxu0 0.0
    %66 = vmatpush.msra.mxu0 0.0
    %67 = vmatpush.msra.mxu0 0.0
    %68 = vmatpush.msra.mxu0 0.0
    %69 = vmatpush.msra.mxu0 0.0
    %70 = vmatpush.msra.mxu0 0.0
    %71 = vmatpush.msra.mxu0 0.0
    %72 = vmatpush.msra.mxu0 %v15
    %73 = vmatmul.f32.gmra.mxu0 %v46
    %v74 = vpop.f32.mrf.mxu0
    %v75 = vadd.f32 %v27, %v74
    %76 = vmatmul.f32.gmra.mxu0 %v49
    %v77 = vpop.f32.mrf.mxu0
    %v78 = vadd.f32 %v32, %v77
    %79 = vmatmul.f32.gmra.mxu0 %v52
    %v80 = vpop.f32.mrf.mxu0
    %v81 = vadd.f32 %v37, %v80
    %82 = vmatmul.f32.gmra.mxu0 %v55
    %v83 = vpop.f32.mrf.mxu0
    %v84 = vadd.f32 %v42, %v83
    %85 = vdwg.mxu0
    %v86 = vmax.f32 %v75, 0.0
    %v87 = vmax.f32 %v78, 0.0
    %v88 = vmax.f32 %v81, 0.0
    %v89 = vmax.f32 %v84, 0.0
    %90 = vst [vmem:[#allocation2] sm:$0xff] %v86
    %91 = vst [vmem:[#allocation2 + $0x8] sm:$0xff] %v87
    %92 = vst [vmem:[#allocation2 + $0x10] sm:$0xff] %v88
    %93 = vst [vmem:[#allocation2 + $0x18] sm:$0xff] %v89
    // Predicated region
    $region14: #{tpu_custom_call.1} parent=1 // pred_check
      _
    $region15: #{tpu_custom_call.1} parent=1 // pred_check_branch
      %95 = sbr.rel (0) target = $region17
    $region16: #{tpu_custom_call.1} parent=1 // pred_region
      %97 = vsyncadd [#allocation3], 0
      %s98 = sshll.u32 [#allocation2], 4
      %s99 = int_to_ptr.vmem [resolvable:$true] %s98
      %s100 = sshll.u32 %s3, 4
      %s101 = int_to_ptr.hbm [resolvable:$true] %s100
      %106 = dma.vmem_to_hbm [thread:$0]  %s99, 512, %s101, [#allocation3], 128, 128, 8
    $region17: #{tpu_custom_call.1} parent=1 // pred_fallthru
      _
    // Predicated region
    $region18: #{tpu_custom_call.1} parent=1 // pred_check
      _
    $region19: #{tpu_custom_call.1} parent=1 // pred_check_branch
      %108 = sbr.rel (0) target = $region21
    $region20: #{tpu_custom_call.1} parent=1 // pred_region
      %110 = dma.done [#allocation3], 512
    $region21: #{tpu_custom_call.1} parent=1 // pred_fallthru
      _
    %111 = vsyncpa [#allocation3], 1

</llo_original>
